<compile_context>
chip_gen: v7x
topology: tpu7x:2x2x1
jax: 0.10.0
libtpu: 0.0.40
codegen_flags: <defaults>
</compile_context>

<pallas_src>
import functools

import jax
import jax.numpy as jnp
from jax.experimental import pallas as pl
from jax.experimental.pallas import tpu as pltpu


_VMEM_LIMIT = 48 * 1024 * 1024    # scoped VMEM limit (v7x physical is 64 MiB)
_VMEM_BUDGET = 26 * 1024 * 1024   # block-sizing budget: io double-buffers + temps


def _round_up(a, m):
    return (a + m - 1) // m * m


@functools.lru_cache(maxsize=None)
def _has_bf16_valu():
    """bf16 VALU exists on v6e / v7x; v5e (and older) must upcast to f32."""
    try:
        kind = jax.devices()[0].device_kind.lower()
    except Exception:
        return False
    return ("v6" in kind) or ("v7" in kind) or ("7x" in kind)


def _compute_dtype(dtype):
    if dtype == jnp.bfloat16 and _has_bf16_valu():
        return jnp.bfloat16
    return jnp.float32


# --------------------------------------------------------------------------
# Kernels
# --------------------------------------------------------------------------
def _dkw_native_kernel(x_ref, o_ref, *, d, compute_dtype):
    """Native-layout block (rows, 128*d): unit g of a row owns lanes [g*d, (g+1)*d).

    Masking proof: w % d == 0, so every dendrite group of d consecutive flat
    elements lies entirely inside one row.  For a masked lane (p >= j or
    p <= d-1-j) the rolled source lane is always inside the same row/group,
    so pltpu.roll's wraparound lanes never leak into the result.
    """
    x = x_ref[...]                                   # io dtype, lane-dense load
    w = x.shape[1]
    assert w % d == 0                                # ties the masking proof above
    xf = x.astype(compute_dtype)                     # bf16-native on v6e/v7x, f32 on v5e
    lane = jax.lax.broadcasted_iota(jnp.int32, x.shape, 1)
    p = lane % d                                     # dendrite position of each lane

    # Group max broadcast to every lane of the group.  Rolls run on the XLU
    # (idle in this HBM-bound kernel); masks keep neighbouring groups out.
    m = xf
    for j in range(1, d):
        lj = pltpu.roll(xf, shift=j, axis=1)         # value from lane l-j (left mate)
        rj = pltpu.roll(xf, shift=w - j, axis=1)     # value from lane l+j (right mate)
        m = jnp.maximum(m, jnp.where(p >= j, lj, -jnp.inf))
        m = jnp.maximum(m, jnp.where(p <= d - 1 - j, rj, -jnp.inf))

    # First-occurrence tie-break: a lane loses if an EARLIER group-mate also
    # attains the max.  Re-roll xf (cheap XLU) instead of retaining d-1 f32
    # block temporaries.
    hit = xf == m
    earlier = (p >= 1) & (pltpu.roll(xf, shift=1, axis=1) == m)
    for j in range(2, d):
        earlier = earlier | ((p >= j) & (pltpu.roll(xf, shift=j, axis=1) == m))
    keep = hit & jnp.logical_not(earlier)

    o_ref[...] = jnp.where(keep, x, jnp.zeros_like(x))   # lane-dense unmasked store


def _dkw_deinterleaved_kernel(x_ref, o_ref, *, d, compute_dtype):
    """De-interleaved block (d, rows, lanes): reduce over the tiny leading d axis.

    Two passes over VMEM (re-loads are ~free: 3 vld/cycle) so at most one
    compute-dtype slab (m) plus small masks stay live — no d live f32 slabs.
    """
    # Pass 1: group max.
    m = x_ref[0].astype(compute_dtype)
    for j in range(1, d):
        m = jnp.maximum(m, x_ref[j].astype(compute_dtype))
    # Pass 2: first-occurrence winner keeps its value, everyone else -> 0.
    earlier = None
    for j in range(d):
        xj = x_ref[j]
        hit = xj.astype(compute_dtype) == m
        keep = hit if earlier is None else hit & jnp.logical_not(earlier)
        o_ref[j] = jnp.where(keep, xj, jnp.zeros_like(xj))
        earlier = hit if earlier is None else earlier | hit


# --------------------------------------------------------------------------
# Wrappers
# --------------------------------------------------------------------------
def _dkw_native(x):
    """Interleaved-layout path (any shape, d <= 8): ~1 HBM read + 1 HBM write."""
    b, u, d, _ = x.shape
    n = b * u
    w = 128 * d                                      # lane width: multiple of 128 AND of d
    total = n * d
    r = pl.cdiv(total, w)
    padded = r * w

    flat = x.reshape(total)                          # free row-major view
    if padded != total:
        # Padding is a whole number of zero groups (padded-total is a multiple
        # of d), so no real group ever straddles the pad boundary.
        flat = jnp.pad(flat, (0, padded - total))
    x2 = flat.reshape(r, w)                          # free reshape of the flat buffer

    cdt = _compute_dtype(x.dtype)
    io = x.dtype.itemsize
    # VMEM budget: double-buffered in+out blocks (io dtype) + ~5 block-sized
    # compute-dtype temporaries (xf, m, roll results, masks).
    per_row = w * (4 * io + 5 * jnp.dtype(cdt).itemsize)
    if r <= 8:
        rt = r                                       # full-extent sublane block
    else:
        rt = max(8, min(_VMEM_BUDGET // per_row, 8192) // 8 * 8)
        # Keep >=2 (ideally >=4) grid steps so ("parallel",) can shard across
        # v7x's two TensorCores and the DMA pipeline has blocks to overlap.
        steps = 4 if r > 32 else 2 if r >= 16 else 1
        if steps > 1:
            rt = min(rt, _round_up(pl.cdiv(r, steps), 8))
        rt = max(8, min(rt, r // 8 * 8))

    out = pl.pallas_call(
        functools.partial(_dkw_native_kernel, d=d, compute_dtype=cdt),
        out_shape=jax.ShapeDtypeStruct((r, w), x.dtype),
        grid=(pl.cdiv(r, rt),),
        in_specs=[pl.BlockSpec((rt, w), lambda i: (i, 0))],
        out_specs=pl.BlockSpec((rt, w), lambda i: (i, 0)),
        compiler_params=pltpu.CompilerParams(
            dimension_semantics=("parallel",),
            vmem_limit_bytes=_VMEM_LIMIT),
        cost_estimate=pl.CostEstimate(
            flops=int(r) * int(w) * 6 * int(d),
            transcendentals=0,
            bytes_accessed=2 * int(r) * int(w) * int(io)),
    )(x2)

    out = out.reshape(-1)
    if padded != total:
        out = out[:total]
    return out.reshape(b, u, d, 1)


def _dkw_deinterleaved(x):
    """General path (d > 8 or native fallback): single de-interleave to (D, R, C)."""
    b, u, d, _ = x.shape
    n = b * u
    cdt = _compute_dtype(x.dtype)

    cw = 512                                         # lane width (multiple of 128)
    while cw > 128 and n < cw * 8:
        cw //= 2
    n_pad = _round_up(n, cw * 8)                     # rows become a multiple of 8
    rp = n_pad // cw

    xt = jnp.transpose(x.reshape(n, d))              # (d, n): the single relayout pass
    xt = jnp.pad(xt, ((0, 0), (0, n_pad - n))).reshape(d, rp, cw)

    io = x.dtype.itemsize
    # Double-buffered in+out (d, rt, cw) blocks + ~3 (rt, cw) compute temps.
    per_row = d * cw * 4 * io + 3 * cw * jnp.dtype(cdt).itemsize
    rt = max(8, min(_VMEM_BUDGET // per_row, rp) // 8 * 8)
    steps = 4 if rp > 32 else 2 if rp >= 16 else 1
    if steps > 1:
        rt = min(rt, _round_up(pl.cdiv(rp, steps), 8))

    out = pl.pallas_call(
        functools.partial(_dkw_deinterleaved_kernel, d=d, compute_dtype=cdt),
        out_shape=jax.ShapeDtypeStruct((d, rp, cw), x.dtype),
        grid=(pl.cdiv(rp, rt),),
        in_specs=[pl.BlockSpec((d, rt, cw), lambda i: (0, i, 0))],
        out_specs=pl.BlockSpec((d, rt, cw), lambda i: (0, i, 0)),
        compiler_params=pltpu.CompilerParams(
            dimension_semantics=("parallel",),
            vmem_limit_bytes=_VMEM_LIMIT),
        cost_estimate=pl.CostEstimate(
            flops=int(d) * int(rp) * int(cw) * 4,
            transcendentals=0,
            bytes_accessed=2 * int(d) * int(rp) * int(cw) * int(io)),
    )(xt)

    out = out.reshape(d, n_pad)[:, :n]
    return jnp.transpose(out).reshape(b, u, d, 1)


def _reference(x):
    """Pure-JAX reference of the PyTorch forward (k=1, first-occurrence ties)."""
    d = x.shape[2]
    xs = x[..., 0]
    m = jnp.max(xs, axis=2, keepdims=True)
    idx = jax.lax.broadcasted_iota(jnp.int32, xs.shape, 2)
    winner = jnp.min(jnp.where(xs == m, idx, d), axis=2, keepdims=True)
    return jnp.where(idx == winner, xs, 0.0)[..., None].astype(x.dtype)


@functools.lru_cache(maxsize=None)
def _native_path_ok(d, dtype_name):
    """Validate the pltpu.roll lowering / tie-break numerics once per (d, dtype).

    Probe shape is lane-unaligned on purpose so the pad+slice path and a
    partial edge block are exercised too.  On failure we silently fall back
    to the de-interleaved path (always correct, just slower).
    """
    try:
        probe = jax.random.normal(jax.random.PRNGKey(123), (3, 380, d, 1),
                                  dtype=jnp.float32).astype(dtype_name)
        got = jax.block_until_ready(_dkw_native(probe))
        return bool(jnp.array_equal(got, _reference(probe)))
    except Exception:
        return False


def dendrite_kwinners2d(x, k=1):
    """Forward pass of DendriteKWinners2d: x is (batch, units, dendrites, 1)."""
    if k != 1:
        # TODO(synk): general k>1 dendrite top-k scatter not implemented (module default is k=1).
        raise NotImplementedError("Only k=1 is implemented in the Pallas kernels.")
    b, u, d, one = x.shape
    assert one == 1
    if d == 1:
        return x                                     # every dendrite is its own winner
    if d <= 8 and _native_path_ok(d, str(x.dtype)):
        return _dkw_native(x)                        # ~1 HBM read + 1 HBM write
    return _dkw_deinterleaved(x)


# --------------------------------------------------------------------------
# Demo / self-check
# --------------------------------------------------------------------------
if __name__ == "__main__":
    key = jax.random.PRNGKey(0)
    k1, k2, k3, k4 = jax.random.split(key, 4)

    # Module-default small shape: batch=2, units=16, dendrites_per_neuron=3.
    # (self.n = prod(x.shape[1:]) in the module is bookkeeping only.)
    x_small = jax.random.normal(k1, (2, 16, 3, 1), dtype=jnp.float32)
    y = jax.block_until_ready(dendrite_kwinners2d(x_small))
    assert y.shape == x_small.shape
    assert jnp.array_equal(y, _reference(x_small)), "small-shape mismatch"

    # Ties (quantized values + an all-equal group): first-occurrence winner.
    x_tie = jnp.floor(x_small * 2.0).at[0, 0].set(1.0)
    y = jax.block_until_ready(dendrite_kwinners2d(x_tie))
    assert jnp.array_equal(y, _reference(x_tie)), "tie-break mismatch"

    # Lane-aligned shape (batch*units % 128 == 0): zero-copy fast path.
    x_big = jax.random.normal(k2, (4, 1024, 3, 1), dtype=jnp.float32)
    y = jax.block_until_ready(dendrite_kwinners2d(x_big))
    assert jnp.array_equal(y, _reference(x_big)), "aligned-shape mismatch"

    # Unaligned shape with d=5: pad-and-slice fast path (no transpose sandwich).
    x_odd = jax.random.normal(k3, (2, 100, 5, 1), dtype=jnp.float32)
    y = jax.block_until_ready(dendrite_kwinners2d(x_odd))
    assert jnp.array_equal(y, _reference(x_odd)), "unaligned-shape mismatch"

    # d > 8 routes to the de-interleaved kernel.
    x_d10 = jax.random.normal(k4, (2, 64, 10, 1), dtype=jnp.float32)
    y = jax.block_until_ready(dendrite_kwinners2d(x_d10))
    assert jnp.array_equal(y, _reference(x_d10)), "d>8 path mismatch"

    print("KERNEL_OK")
</pallas_src>

<mosaic_0001>
module attributes {stable_mosaic.version = 11 : i64} {
  func.func @_dkw_native_kernel(%arg0: i32, %arg1: memref<8x384xf32, #tpu.memory_space<vmem>>, %arg2: memref<8x384xf32, #tpu.memory_space<vmem>>) attributes {dimension_semantics = [#tpu.dimension_semantics<parallel>], iteration_bounds = array<i64: 2>, scalar_prefetch = 0 : i64, scratch_operands = 0 : i64, tpu.core_type = #tpu.core_type<tc>, window_params = [{transform_indices = @transform_0, window_bounds = array<i64: 8, 384>}, {transform_indices = @transform_1, window_bounds = array<i64: 8, 384>}]} {
    %c0 = arith.constant 0 : index
    %c0_0 = arith.constant 0 : index
    %0 = vector.load %arg1[%c0, %c0_0] : memref<8x384xf32, #tpu.memory_space<vmem>>, vector<8x384xf32>
    %1 = tpu.iota {dimensions = array<i32: 1>} : vector<8x384xi32>
    %c3_i32 = arith.constant 3 : i32
    %c0_i32 = arith.constant 0 : i32
    %2 = arith.cmpi eq, %c3_i32, %c0_i32 : i32
    %c1_i32 = arith.constant 1 : i32
    %3 = arith.select %2, %c1_i32, %c3_i32 : i32
    %4 = vector.broadcast %3 : i32 to vector<8x384xi32>
    %5 = arith.remsi %1, %4 : vector<8x384xi32>
    %c0_i32_1 = arith.constant 0 : i32
    %6 = vector.broadcast %c0_i32_1 : i32 to vector<8x384xi32>
    %7 = arith.cmpi ne, %5, %6 : vector<8x384xi32>
    %c0_i32_2 = arith.constant 0 : i32
    %8 = vector.broadcast %c0_i32_2 : i32 to vector<8x384xi32>
    %9 = arith.cmpi slt, %5, %8 : vector<8x384xi32>
    %c0_i32_3 = arith.constant 0 : i32
    %10 = arith.cmpi slt, %3, %c0_i32_3 : i32
    %11 = vector.broadcast %10 : i1 to vector<8x384xi1>
    %12 = vector.broadcast %11 : vector<8x384xi1> to vector<8x384xi1>
    %13 = arith.xori %9, %12 : vector<8x384xi1>
    %14 = arith.andi %13, %7 : vector<8x384xi1>
    %15 = vector.broadcast %3 : i32 to vector<8x384xi32>
    %16 = arith.addi %5, %15 : vector<8x384xi32>
    %17 = arith.select %14, %16, %5 : vector<8x384xi1>, vector<8x384xi32>
    %c1_i32_4 = arith.constant 1 : i32
    %18 = tpu.dynamic_rotate %0 by %c1_i32_4 dim 1 : vector<8x384xf32>, i32 -> vector<8x384xf32>
    %c383_i32 = arith.constant 383 : i32
    %19 = tpu.dynamic_rotate %0 by %c383_i32 dim 1 : vector<8x384xf32>, i32 -> vector<8x384xf32>
    %c1_i32_5 = arith.constant 1 : i32
    %20 = vector.broadcast %c1_i32_5 : i32 to vector<8x384xi32>
    %21 = arith.cmpi sge, %17, %20 : vector<8x384xi32>
    %cst = arith.constant 0xFF800000 : f32
    %22 = vector.broadcast %cst : f32 to vector<8x384xf32>
    %23 = arith.select %21, %18, %22 : vector<8x384xi1>, vector<8x384xf32>
    %24 = arith.maximumf %0, %23 : vector<8x384xf32>
    %c1_i32_6 = arith.constant 1 : i32
    %25 = vector.broadcast %c1_i32_6 : i32 to vector<8x384xi32>
    %26 = arith.cmpi sle, %17, %25 : vector<8x384xi32>
    %cst_7 = arith.constant 0xFF800000 : f32
    %27 = vector.broadcast %cst_7 : f32 to vector<8x384xf32>
    %28 = arith.select %26, %19, %27 : vector<8x384xi1>, vector<8x384xf32>
    %29 = arith.maximumf %24, %28 : vector<8x384xf32>
    %c2_i32 = arith.constant 2 : i32
    %30 = tpu.dynamic_rotate %0 by %c2_i32 dim 1 : vector<8x384xf32>, i32 -> vector<8x384xf32>
    %c382_i32 = arith.constant 382 : i32
    %31 = tpu.dynamic_rotate %0 by %c382_i32 dim 1 : vector<8x384xf32>, i32 -> vector<8x384xf32>
    %c2_i32_8 = arith.constant 2 : i32
    %32 = vector.broadcast %c2_i32_8 : i32 to vector<8x384xi32>
    %33 = arith.cmpi sge, %17, %32 : vector<8x384xi32>
    %cst_9 = arith.constant 0xFF800000 : f32
    %34 = vector.broadcast %cst_9 : f32 to vector<8x384xf32>
    %35 = arith.select %33, %30, %34 : vector<8x384xi1>, vector<8x384xf32>
    %36 = arith.maximumf %29, %35 : vector<8x384xf32>
    %c0_i32_10 = arith.constant 0 : i32
    %37 = vector.broadcast %c0_i32_10 : i32 to vector<8x384xi32>
    %38 = arith.cmpi sle, %17, %37 : vector<8x384xi32>
    %cst_11 = arith.constant 0xFF800000 : f32
    %39 = vector.broadcast %cst_11 : f32 to vector<8x384xf32>
    %40 = arith.select %38, %31, %39 : vector<8x384xi1>, vector<8x384xf32>
    %41 = arith.maximumf %36, %40 : vector<8x384xf32>
    %42 = arith.cmpf oeq, %0, %41 : vector<8x384xf32>
    %c1_i32_12 = arith.constant 1 : i32
    %43 = vector.broadcast %c1_i32_12 : i32 to vector<8x384xi32>
    %44 = arith.cmpi sge, %17, %43 : vector<8x384xi32>
    %c1_i32_13 = arith.constant 1 : i32
    %45 = tpu.dynamic_rotate %0 by %c1_i32_13 dim 1 : vector<8x384xf32>, i32 -> vector<8x384xf32>
    %46 = arith.cmpf oeq, %45, %41 : vector<8x384xf32>
    %47 = arith.andi %44, %46 : vector<8x384xi1>
    %c2_i32_14 = arith.constant 2 : i32
    %48 = vector.broadcast %c2_i32_14 : i32 to vector<8x384xi32>
    %49 = arith.cmpi sge, %17, %48 : vector<8x384xi32>
    %c2_i32_15 = arith.constant 2 : i32
    %50 = tpu.dynamic_rotate %0 by %c2_i32_15 dim 1 : vector<8x384xf32>, i32 -> vector<8x384xf32>
    %51 = arith.cmpf oeq, %50, %41 : vector<8x384xf32>
    %52 = arith.andi %49, %51 : vector<8x384xi1>
    %53 = arith.ori %47, %52 : vector<8x384xi1>
    %cst_16 = arith.constant dense<true> : vector<8x384xi1>
    %54 = arith.xori %53, %cst_16 : vector<8x384xi1>
    %55 = arith.andi %42, %54 : vector<8x384xi1>
    %cst_17 = arith.constant 0.000000e+00 : f32
    %56 = vector.broadcast %cst_17 : f32 to vector<8x384xf32>
    %57 = arith.select %55, %0, %56 : vector<8x384xi1>, vector<8x384xf32>
    %c0_18 = arith.constant 0 : index
    %c0_19 = arith.constant 0 : index
    %58 = vector.load %arg2[%c0_18, %c0_19] : memref<8x384xf32, #tpu.memory_space<vmem>>, vector<8x384xf32>
    tpu.vector_store %arg2[%c0_18, %c0_19], %57 {strides = array<i32>} : memref<8x384xf32, #tpu.memory_space<vmem>>, vector<8x384xf32>,
    return
  }
  func.func @transform_0(%arg0: i32) -> (i32, i32) {
    %c0_i32 = arith.constant 0 : i32
    %c0_i32_0 = arith.constant 0 : i32
    return %arg0, %c0_i32 : i32, i32
  }
  func.func @transform_1(%arg0: i32) -> (i32, i32) {
    %c0_i32 = arith.constant 0 : i32
    %c0_i32_0 = arith.constant 0 : i32
    return %arg0, %c0_i32 : i32, i32
  }
}

module attributes {stable_mosaic.version = 11 : i64} {
  func.func @_dkw_deinterleaved_kernel(%arg0: i32, %arg1: memref<3x8x128xf32, #tpu.memory_space<vmem>>, %arg2: memref<3x8x128xf32, #tpu.memory_space<vmem>>) attributes {dimension_semantics = [#tpu.dimension_semantics<parallel>], iteration_bounds = array<i64: 1>, scalar_prefetch = 0 : i64, scratch_operands = 0 : i64, tpu.core_type = #tpu.core_type<tc>, window_params = [{transform_indices = @transform_0, window_bounds = array<i64: 3, 8, 128>}, {transform_indices = @transform_1, window_bounds = array<i64: 3, 8, 128>}]} {
    %c0 = arith.constant 0 : index
    %c0_0 = arith.constant 0 : index
    %c0_1 = arith.constant 0 : index
    %0 = vector.load %arg1[%c0, %c0_0, %c0_1] : memref<3x8x128xf32, #tpu.memory_space<vmem>>, vector<1x8x128xf32>
    %1 = vector.shape_cast %0 : vector<1x8x128xf32> to vector<8x128xf32>
    %c1 = arith.constant 1 : index
    %c0_2 = arith.constant 0 : index
    %c0_3 = arith.constant 0 : index
    %2 = vector.load %arg1[%c1, %c0_2, %c0_3] : memref<3x8x128xf32, #tpu.memory_space<vmem>>, vector<1x8x128xf32>
    %3 = vector.shape_cast %2 : vector<1x8x128xf32> to vector<8x128xf32>
    %4 = arith.maximumf %1, %3 : vector<8x128xf32>
    %c2 = arith.constant 2 : index
    %c0_4 = arith.constant 0 : index
    %c0_5 = arith.constant 0 : index
    %5 = vector.load %arg1[%c2, %c0_4, %c0_5] : memref<3x8x128xf32, #tpu.memory_space<vmem>>, vector<1x8x128xf32>
    %6 = vector.shape_cast %5 : vector<1x8x128xf32> to vector<8x128xf32>
    %7 = arith.maximumf %4, %6 : vector<8x128xf32>
    %c0_6 = arith.constant 0 : index
    %c0_7 = arith.constant 0 : index
    %c0_8 = arith.constant 0 : index
    %8 = vector.load %arg1[%c0_6, %c0_7, %c0_8] : memref<3x8x128xf32, #tpu.memory_space<vmem>>, vector<1x8x128xf32>
    %9 = vector.shape_cast %8 : vector<1x8x128xf32> to vector<8x128xf32>
    %10 = arith.cmpf oeq, %9, %7 : vector<8x128xf32>
    %cst = arith.constant 0.000000e+00 : f32
    %11 = vector.broadcast %cst : f32 to vector<8x128xf32>
    %12 = arith.select %10, %9, %11 : vector<8x128xi1>, vector<8x128xf32>
    %c0_9 = arith.constant 0 : index
    %c0_10 = arith.constant 0 : index
    %c0_11 = arith.constant 0 : index
    %13 = vector.load %arg2[%c0_9, %c0_10, %c0_11] : memref<3x8x128xf32, #tpu.memory_space<vmem>>, vector<1x8x128xf32>
    %14 = vector.shape_cast %13 : vector<1x8x128xf32> to vector<8x128xf32>
    %15 = vector.shape_cast %12 : vector<8x128xf32> to vector<1x8x128xf32>
    tpu.vector_store %arg2[%c0_9, %c0_10, %c0_11], %15 {strides = array<i32>} : memref<3x8x128xf32, #tpu.memory_space<vmem>>, vector<1x8x128xf32>,
    %c1_12 = arith.constant 1 : index
    %c0_13 = arith.constant 0 : index
    %c0_14 = arith.constant 0 : index
    %16 = vector.load %arg1[%c1_12, %c0_13, %c0_14] : memref<3x8x128xf32, #tpu.memory_space<vmem>>, vector<1x8x128xf32>
    %17 = vector.shape_cast %16 : vector<1x8x128xf32> to vector<8x128xf32>
    %18 = arith.cmpf oeq, %17, %7 : vector<8x128xf32>
    %cst_15 = arith.constant dense<true> : vector<8x128xi1>
    %19 = arith.xori %10, %cst_15 : vector<8x128xi1>
    %20 = arith.andi %18, %19 : vector<8x128xi1>
    %cst_16 = arith.constant 0.000000e+00 : f32
    %21 = vector.broadcast %cst_16 : f32 to vector<8x128xf32>
    %22 = arith.select %20, %17, %21 : vector<8x128xi1>, vector<8x128xf32>
    %c1_17 = arith.constant 1 : index
    %c0_18 = arith.constant 0 : index
    %c0_19 = arith.constant 0 : index
    %23 = vector.load %arg2[%c1_17, %c0_18, %c0_19] : memref<3x8x128xf32, #tpu.memory_space<vmem>>, vector<1x8x128xf32>
    %24 = vector.shape_cast %23 : vector<1x8x128xf32> to vector<8x128xf32>
    %25 = vector.shape_cast %22 : vector<8x128xf32> to vector<1x8x128xf32>
    tpu.vector_store %arg2[%c1_17, %c0_18, %c0_19], %25 {strides = array<i32>} : memref<3x8x128xf32, #tpu.memory_space<vmem>>, vector<1x8x128xf32>,
    %26 = arith.ori %10, %18 : vector<8x128xi1>
    %c2_20 = arith.constant 2 : index
    %c0_21 = arith.constant 0 : index
    %c0_22 = arith.constant 0 : index
    %27 = vector.load %arg1[%c2_20, %c0_21, %c0_22] : memref<3x8x128xf32, #tpu.memory_space<vmem>>, vector<1x8x128xf32>
    %28 = vector.shape_cast %27 : vector<1x8x128xf32> to vector<8x128xf32>
    %29 = arith.cmpf oeq, %28, %7 : vector<8x128xf32>
    %cst_23 = arith.constant dense<true> : vector<8x128xi1>
    %30 = arith.xori %26, %cst_23 : vector<8x128xi1>
    %31 = arith.andi %29, %30 : vector<8x128xi1>
    %cst_24 = arith.constant 0.000000e+00 : f32
    %32 = vector.broadcast %cst_24 : f32 to vector<8x128xf32>
    %33 = arith.select %31, %28, %32 : vector<8x128xi1>, vector<8x128xf32>
    %c2_25 = arith.constant 2 : index
    %c0_26 = arith.constant 0 : index
    %c0_27 = arith.constant 0 : index
    %34 = vector.load %arg2[%c2_25, %c0_26, %c0_27] : memref<3x8x128xf32, #tpu.memory_space<vmem>>, vector<1x8x128xf32>
    %35 = vector.shape_cast %34 : vector<1x8x128xf32> to vector<8x128xf32>
    %36 = vector.shape_cast %33 : vector<8x128xf32> to vector<1x8x128xf32>
    tpu.vector_store %arg2[%c2_25, %c0_26, %c0_27], %36 {strides = array<i32>} : memref<3x8x128xf32, #tpu.memory_space<vmem>>, vector<1x8x128xf32>,
    return
  }
  func.func @transform_0(%arg0: i32) -> (i32, i32, i32) {
    %c0_i32 = arith.constant 0 : i32
    %c0_i32_0 = arith.constant 0 : i32
    %c0_i32_1 = arith.constant 0 : i32
    return %c0_i32, %arg0, %c0_i32_0 : i32, i32, i32
  }
  func.func @transform_1(%arg0: i32) -> (i32, i32, i32) {
    %c0_i32 = arith.constant 0 : i32
    %c0_i32_0 = arith.constant 0 : i32
    %c0_i32_1 = arith.constant 0 : i32
    return %c0_i32, %arg0, %c0_i32_0 : i32, i32, i32
  }
}

</mosaic_0001>

<llo_original>
// kernel: tpu_custom_call.1
$region0: #{tpu_custom_call.1}
  #allocation0 [shape = 'u32[]', space=smem, size = 0x4, offset = 0x4, fixed_abs, tag = 'smem constant byte address 0x4 - core index']
  #allocation1 [shape = 'u32[144,128]{1,0:T(1,128)}', space=vmem, size = 0x12000, scoped, tag = 'internal scratch']
  %s0 = inlined_call_operand.hbm [shape: f32[9,384], index: 0, kind: input, shape index: {}]
  %s1 = inlined_call_operand.hbm [shape: f32[9,384], index: 1, kind: output, shape index: {}]
  %s2 = sld [smem:[#allocation0]]
  $region41: #{tpu_custom_call.1} parent=0
    _
  %s4 = ssub.s32 1, %s2
  %s5 = scalar_select 0, %s4, %s2
  $region1: #{tpu_custom_call.1} parent=0
    #allocation2 [shape = 'u8[24576]{0}', space=vmem, size = 0x6000, scoped, tag = 'input window, operand 0']
    #allocation3 [shape = 's32[2]{0}', space=sflag, size = 0x8, scoped, tag = 'scoped memory for tpu_custom_call.1']
    #allocation4 [shape = 's32[2]{0}', space=sflag, size = 0x8, scoped, tag = 'scoped memory for tpu_custom_call.1']
    #allocation5 [shape = 'u8[24576]{0}', space=vmem, size = 0x6000, scoped, tag = 'output window, operand 0']
    %6 = vsyncpa [#allocation3], 0
    %s7 = scalar_lea.sflag [#allocation3], 1
    %8 = vsyncpa %s7, 0
    %9 = vsyncpa [#allocation4], 0
    %s10 = scalar_lea.sflag [#allocation4], 1
    %11 = vsyncpa %s10, 0
    loop: start=0, step=1, limit=4
    $region2: #{tpu_custom_call.1} parent=1 // loop_pre_header
      _
    $region3: #{tpu_custom_call.1} parent=1 // loop_header
      %s13 = sphi 0, %s17
      %p14 = scmp.ge.s32.totalorder %s13, 4
      %s23 = sphi 0, %s25
      %s26 = sphi 0, %s23
      %s27 = sphi 0, %s26
      %s43 = sphi 0, %s27
      %s49 = sphi 0, %s51
      %s52 = sphi 0, %s49
      %s53 = sphi 0, %s52
      %s69 = sphi 0, %s53
    $region4: #{tpu_custom_call.1} parent=1 // loop_header_branch
      %16 = sbr.rel (%p14) target = $region8
    $region5: #{tpu_custom_call.1} parent=1 // loop_body
      %s18 = ssub.s32 %s13, 1
      %s19 = ssub.s32 %s13, 2
      %s20 = sadd.s32 %s13, 1
      %s21 = ssub.s32 %s13, %s20
      %p22 = scmp.eq.s32.totalorder %s21, 0
      %s24 = sadd.s32 %s23, 1
      %s25 = scalar_select %p22, %s23, %s24
      %p28 = pneg %p22
      %p29 = scmp.eq.s32.totalorder %s13, 1
      %p30 = por %p28, %p29
      %p31 = scmp.ne.s32.totalorder %s23, %s26
      %p32 = scmp.eq.s32.totalorder %s13, 0
      %p33 = por %p31, %p32
      %p34 = scmp.ne.s32.totalorder %s23, %s26
      %p35 = scmp.eq.s32.totalorder %s18, 1
      %p36 = por %p34, %p35
      %p37 = scmp.ne.s32.totalorder %s26, %s27
      %p38 = scmp.eq.s32.totalorder %s18, 0
      %p39 = por %p37, %p38
      %p40 = scmp.ne.s32.totalorder %s26, %s27
      %p41 = scmp.eq.s32.totalorder %s19, 1
      %p42 = por %p40, %p41
      %p44 = scmp.ne.s32.totalorder %s27, %s43
      %p45 = scmp.eq.s32.totalorder %s19, 0
      %p46 = por %p44, %p45
      %s47 = ssub.s32 %s13, %s20
      %p48 = scmp.eq.s32.totalorder %s47, 0
      %s50 = sadd.s32 %s49, 1
      %s51 = scalar_select %p48, %s49, %s50
      %p54 = pneg %p48
      %p55 = scmp.eq.s32.totalorder %s13, 1
      %p56 = por %p54, %p55
      %p57 = scmp.ne.s32.totalorder %s49, %s52
      %p58 = scmp.eq.s32.totalorder %s13, 0
      %p59 = por %p57, %p58
      %p60 = scmp.ne.s32.totalorder %s49, %s52
      %p61 = scmp.eq.s32.totalorder %s18, 1
      %p62 = por %p60, %p61
      %p63 = scmp.ne.s32.totalorder %s52, %s53
      %p64 = scmp.eq.s32.totalorder %s18, 0
      %p65 = por %p63, %p64
      %p66 = scmp.ne.s32.totalorder %s52, %s53
      %p67 = scmp.eq.s32.totalorder %s19, 1
      %p68 = por %p66, %p67
      %p70 = scmp.ne.s32.totalorder %s53, %s69
      %p71 = scmp.eq.s32.totalorder %s19, 0
      %p72 = por %p70, %p71
      %p73 = scmp.le.s32.totalorder 1, %s13
      %p74 = scmp.lt.s32.totalorder %s13, 3
      %p75 = pnand %p73, %p74
      %p76 = pneg %p75
      // Predicated region
      $region9: #{tpu_custom_call.1} parent=5 // pred_check
        _
      $region10: #{tpu_custom_call.1} parent=5 // pred_check_branch
        %78 = sbr.rel (%p75) target = $region12
      $region11: #{tpu_custom_call.1} parent=5 // pred_region
        %s79 = ssub.s32 %s13, 1
      $region12: #{tpu_custom_call.1} parent=5 // pred_fallthru
        _
      %p80 = scmp.lt.s32.totalorder %s13, 2
      // Predicated region
      $region13: #{tpu_custom_call.1} parent=5 // pred_check
        %p81 = pneg %p80
      $region14: #{tpu_custom_call.1} parent=5 // pred_check_branch
        %83 = sbr.rel (%p81) target = $region16
      $region15: #{tpu_custom_call.1} parent=5 // pred_region
        // Predicated region
        $region17: #{tpu_custom_call.1} parent=15 // pred_check
          %p84 = pneg %p33
        $region18: #{tpu_custom_call.1} parent=15 // pred_check_branch
          %86 = sbr.rel (%p84) target = $region20
        $region19: #{tpu_custom_call.1} parent=15 // pred_region
          %s87 = sand.u32 %s23, 1
          %s88 = scalar_lea.sflag [#allocation3], %s87
          %s89 = sand.u32 %s23, 1
          %s90 = smul.addr %s89, 24
          %s91 = scalar_lea.vmem [#allocation2], %s90
          %s93 = ssub.s32 384, 384
          %94 = vsyncadd %s88, %s93
          %s95 = smul.addr %s13, 3
          %s96 = smul.addr %s95, 128
          %s97 = scalar_lea.hbm %s0, %s96
          %s99 = sshll.u32 %s91, 4
          %s100 = int_to_ptr.vmem [resolvable:$true] %s99
          %102 = dma.hbm_to_vmem [thread:$0]  %s97, 384, %s100, %s88
        $region20: #{tpu_custom_call.1} parent=15 // pred_fallthru
          _
      $region16: #{tpu_custom_call.1} parent=5 // pred_fallthru
        _
      %p103 = scmp.le.s32.totalorder 1, %s13
      %p104 = scmp.lt.s32.totalorder %s13, 3
      %p105 = pnand %p103, %p104
      %p106 = pneg %p105
      // Predicated region
      $region21: #{tpu_custom_call.1} parent=5 // pred_check
        _
      $region22: #{tpu_custom_call.1} parent=5 // pred_check_branch
        %108 = sbr.rel (%p105) target = $region24
      $region23: #{tpu_custom_call.1} parent=5 // pred_region
        %s109 = ssub.s32 %s13, 1
        %s110 = sand.u32 %s26, 1
        %s111 = scalar_lea.sflag [#allocation3], %s110
        %s112 = sand.u32 %s26, 1
        %s113 = smul.addr %s112, 24
        %s114 = scalar_lea.vmem [#allocation2], %s113
        // Predicated region
        $region25: #{tpu_custom_call.1} parent=23 // pred_check
          %p115 = pneg %p39
        $region26: #{tpu_custom_call.1} parent=23 // pred_check_branch
          %117 = sbr.rel (%p115) target = $region28
        $region27: #{tpu_custom_call.1} parent=23 // pred_region
          %118 = dma.done %s111, 384
        $region28: #{tpu_custom_call.1} parent=23 // pred_fallthru
          _
        %s119 = sand.u32 %s26, 1
        %s120 = scalar_lea.sflag [#allocation3], %s119
        %s121 = sand.u32 %s26, 1
        %s122 = smul.addr %s121, 24
        %s123 = scalar_lea.vmem [#allocation2], %s122
        %p124 = pneg %p39
        %p125 = pneg %p36
        %p126 = pneg %p65
        %p127 = pneg %p62
        %s128 = sand.u32 %s52, 1
        %s129 = scalar_lea.sflag [#allocation4], %s128
        %s130 = sand.u32 %s52, 1
        %s131 = smul.addr %s130, 24
        %s132 = scalar_lea.vmem [#allocation5], %s131
        %v133 = vld [vmem:[%s114] sm:$0xff]
        %v134 = vld [vmem:[%s114 + $0x8] sm:$0xff]
        %v135 = vld [vmem:[%s114 + $0x10] sm:$0xff]
        %v136 = vlaneseq
        %v137 = vand.u32 %v136, 127
        %v138 = vadd.s32 %v137, 128
        %v139 = vadd.s32 %v137, 256
        %vm140 = vcmp.lt.s32.totalorder %v137, 0
        %v141 = vsub.s32 0, %v137
        %v142 = vsel %vm140, %v141, %v137
        %v143 = vmul.u32.u64.compose %v142, 2863311531
        %v144 = vextract.low.u32 %v143
        %v145 = vextract.high.u32 %v143
        %v146 = vshrl.u32 %v145, 1
        %v147 = vmul.u32 %v146, 3
        %v148 = vsub.s32 %v142, %v147
        %v149 = vsub.s32 0, %v148
        %v150 = vsel %vm140, %v149, %v148
        %vm151 = vcmp.lt.s32.totalorder %v138, 0
        %v152 = vsub.s32 0, %v138
        %v153 = vsel %vm151, %v152, %v138
        %v154 = vmul.u32.u64.compose %v153, 2863311531
        %v155 = vextract.low.u32 %v154
        %v156 = vextract.high.u32 %v154
        %v157 = vshrl.u32 %v156, 1
        %v158 = vmul.u32 %v157, 3
        %v159 = vsub.s32 %v153, %v158
        %v160 = vsub.s32 0, %v159
        %v161 = vsel %vm151, %v160, %v159
        %vm162 = vcmp.lt.s32.totalorder %v139, 0
        %v163 = vsub.s32 0, %v139
        %v164 = vsel %vm162, %v163, %v139
        %v165 = vmul.u32.u64.compose %v164, 2863311531
        %v166 = vextract.low.u32 %v165
        %v167 = vextract.high.u32 %v165
        %v168 = vshrl.u32 %v167, 1
        %v169 = vmul.u32 %v168, 3
        %v170 = vsub.s32 %v164, %v169
        %v171 = vsub.s32 0, %v170
        %v172 = vsel %vm162, %v171, %v170
        %vm173 = vcmp.ne.s32.totalorder %v150, 0
        %vm174 = vcmp.ne.s32.totalorder %v161, 0
        %vm175 = vcmp.ne.s32.totalorder %v172, 0
        %vm176 = vcmp.lt.s32.totalorder %v150, 0
        %vm177 = vcmp.lt.s32.totalorder %v161, 0
        %vm178 = vcmp.lt.s32.totalorder %v172, 0
        %vm179 = vmand %vm176, %vm173
        %vm180 = vmand %vm177, %vm174
        %vm181 = vmand %vm178, %vm175
        %v182 = vadd.s32 %v150, 3
        %v183 = vadd.s32 %v161, 3
        %v184 = vadd.s32 %v172, 3
        %v185 = vsel %vm179, %v182, %v150
        %v186 = vsel %vm180, %v183, %v161
        %v187 = vsel %vm181, %v184, %v172
        %188 = vrot.lane.b32.xlu0 %v133, 1
        %v189 = vpop.permute.xlu0 %188
        %190 = vrot.lane.b32.xlu0 %v134, 1
        %v191 = vpop.permute.xlu0 %190
        %192 = vrot.lane.b32.xlu0 %v135, 1
        %v193 = vpop.permute.xlu0 %192
        %vm194 = vcmp.lt.s32.totalorder %v137, 1
        %v195 = vsel %vm194, %v191, %v193
        %v196 = vsel %vm194, %v189, %v191
        %v197 = vsel %vm194, %v193, %v189
        %198 = vrot.lane.b32.xlu0 %v133, 127
        %v199 = vpop.permute.xlu0 %198
        %200 = vrot.lane.b32.xlu0 %v134, 127
        %v201 = vpop.permute.xlu0 %200
        %202 = vrot.lane.b32.xlu0 %v135, 127
        %v203 = vpop.permute.xlu0 %202
        %vm204 = vcmp.lt.s32.totalorder %v137, 127
        %v205 = vsel %vm204, %v201, %v203
        %v206 = vsel %vm204, %v199, %v201
        %v207 = vsel %vm204, %v203, %v199
        %vm208 = vcmp.ge.s32.totalorder %v185, 1
        %vm209 = vcmp.ge.s32.totalorder %v186, 1
        %vm210 = vcmp.ge.s32.totalorder %v187, 1
        %v211 = vsel %vm208, %v197, -inf
        %v212 = vsel %vm209, %v196, -inf
        %v213 = vsel %vm210, %v195, -inf
        %v214 = vmax.f32 %v133, %v211
        %v215 = vmax.f32 %v134, %v212
        %v216 = vmax.f32 %v135, %v213
        %vm217 = vcmp.le.s32.totalorder %v185, 1
        %vm218 = vcmp.le.s32.totalorder %v186, 1
        %vm219 = vcmp.le.s32.totalorder %v187, 1
        %v220 = vsel %vm217, %v206, -inf
        %v221 = vsel %vm218, %v205, -inf
        %v222 = vsel %vm219, %v207, -inf
        %v223 = vmax.f32 %v214, %v220
        %v224 = vmax.f32 %v215, %v221
        %v225 = vmax.f32 %v216, %v222
        %226 = vrot.lane.b32.xlu0 %v133, 2
        %v227 = vpop.permute.xlu0 %226
        %228 = vrot.lane.b32.xlu0 %v134, 2
        %v229 = vpop.permute.xlu0 %228
        %230 = vrot.lane.b32.xlu0 %v135, 2
        %v231 = vpop.permute.xlu0 %230
        %vm232 = vcmp.lt.s32.totalorder %v137, 2
        %v233 = vsel %vm232, %v229, %v231
        %v234 = vsel %vm232, %v227, %v229
        %v235 = vsel %vm232, %v231, %v227
        %236 = vrot.lane.b32.xlu0 %v133, 126
        %v237 = vpop.permute.xlu0 %236
        %238 = vrot.lane.b32.xlu0 %v134, 126
        %v239 = vpop.permute.xlu0 %238
        %240 = vrot.lane.b32.xlu0 %v135, 126
        %v241 = vpop.permute.xlu0 %240
        %vm242 = vcmp.lt.s32.totalorder %v137, 126
        %v243 = vsel %vm242, %v239, %v241
        %v244 = vsel %vm242, %v237, %v239
        %v245 = vsel %vm242, %v241, %v237
        %vm246 = vcmp.ge.s32.totalorder %v185, 2
        %vm247 = vcmp.ge.s32.totalorder %v186, 2
        %vm248 = vcmp.ge.s32.totalorder %v187, 2
        %v249 = vsel %vm246, %v235, -inf
        %v250 = vsel %vm247, %v234, -inf
        %v251 = vsel %vm248, %v233, -inf
        %v252 = vmax.f32 %v223, %v249
        %v253 = vmax.f32 %v224, %v250
        %v254 = vmax.f32 %v225, %v251
        %vm255 = vcmp.le.s32.totalorder %v185, 0
        %vm256 = vcmp.le.s32.totalorder %v186, 0
        %vm257 = vcmp.le.s32.totalorder %v187, 0
        %v258 = vsel %vm255, %v244, -inf
        %v259 = vsel %vm256, %v243, -inf
        %v260 = vsel %vm257, %v245, -inf
        %v261 = vmax.f32 %v252, %v258
        %v262 = vmax.f32 %v253, %v259
        %v263 = vmax.f32 %v254, %v260
        %vm264 = vcmp.eq.f32.partialorder %v133, %v261
        %vm265 = vcmp.eq.f32.partialorder %v134, %v262
        %vm266 = vcmp.eq.f32.partialorder %v135, %v263
        %vm267 = vcmp.eq.f32.partialorder %v197, %v261
        %vm268 = vcmp.eq.f32.partialorder %v196, %v262
        %vm269 = vcmp.eq.f32.partialorder %v195, %v263
        %vm270 = vmand %vm208, %vm267
        %vm271 = vmand %vm209, %vm268
        %vm272 = vmand %vm210, %vm269
        %vm273 = vcmp.eq.f32.partialorder %v235, %v261
        %vm274 = vcmp.eq.f32.partialorder %v234, %v262
        %vm275 = vcmp.eq.f32.partialorder %v233, %v263
        %vm276 = vmand %vm246, %vm273
        %vm277 = vmand %vm247, %vm274
        %vm278 = vmand %vm248, %vm275
        %vm279 = vmor %vm270, %vm276
        %vm280 = vmor %vm271, %vm277
        %vm281 = vmor %vm272, %vm278
        %vm282 = vmxor %vm279, 1
        %vm283 = vmxor %vm280, 1
        %vm284 = vmxor %vm281, 1
        %vm285 = vmand %vm264, %vm282
        %vm286 = vmand %vm265, %vm283
        %vm287 = vmand %vm266, %vm284
        %v288 = vsel %vm285, %v133, 0.0
        %v289 = vsel %vm286, %v134, 0.0
        %v290 = vsel %vm287, %v135, 0.0
        %291 = vst [vmem:[%s132] sm:$0xff] %v288
        %292 = vst [vmem:[%s132 + $0x8] sm:$0xff] %v289
        %293 = vst [vmem:[%s132 + $0x10] sm:$0xff] %v290
        %s294 = sand.u32 %s52, 1
        %s295 = scalar_lea.sflag [#allocation4], %s294
        %s296 = sand.u32 %s52, 1
        %s297 = smul.addr %s296, 24
        %s298 = scalar_lea.vmem [#allocation5], %s297
        // Predicated region
        $region29: #{tpu_custom_call.1} parent=23 // pred_check
          %p299 = pneg %p62
        $region30: #{tpu_custom_call.1} parent=23 // pred_check_branch
          %301 = sbr.rel (%p299) target = $region32
        $region31: #{tpu_custom_call.1} parent=23 // pred_region
          %s303 = ssub.s32 384, 384
          %304 = vsyncadd %s295, %s303
          %s305 = smul.addr %s18, 3
          %s306 = smul.addr %s305, 128
          %s307 = scalar_lea.hbm %s1, %s306
          %s309 = sshll.u32 %s298, 4
          %s310 = int_to_ptr.vmem [resolvable:$true] %s309
          %312 = dma.vmem_to_hbm [thread:$0]  %s310, 384, %s307, %s295
        $region32: #{tpu_custom_call.1} parent=23 // pred_fallthru
          _
      $region24: #{tpu_custom_call.1} parent=5 // pred_fallthru
        _
      %p313 = scmp.le.s32.totalorder 2, %s13
      // Predicated region
      $region33: #{tpu_custom_call.1} parent=5 // pred_check
        %p314 = pneg %p313
      $region34: #{tpu_custom_call.1} parent=5 // pred_check_branch
        %316 = sbr.rel (%p314) target = $region36
      $region35: #{tpu_custom_call.1} parent=5 // pred_region
        %s317 = ssub.s32 %s13, 2
        // Predicated region
        $region37: #{tpu_custom_call.1} parent=35 // pred_check
          %p318 = pneg %p68
        $region38: #{tpu_custom_call.1} parent=35 // pred_check_branch
          %320 = sbr.rel (%p318) target = $region40
        $region39: #{tpu_custom_call.1} parent=35 // pred_region
          %s321 = sand.u32 %s53, 1
          %s322 = scalar_lea.sflag [#allocation4], %s321
          %s323 = sand.u32 %s53, 1
          %s324 = smul.addr %s323, 24
          %s325 = scalar_lea.vmem [#allocation5], %s324
          %326 = dma.done %s322, 384
        $region40: #{tpu_custom_call.1} parent=35 // pred_fallthru
          _
      $region36: #{tpu_custom_call.1} parent=5 // pred_fallthru
        _
    $region6: #{tpu_custom_call.1} parent=1 // loop_footer
      %s17 = sadd.s32 1, %s13
    $region7: #{tpu_custom_call.1} parent=1 // loop_footer_branch
      %12 = sbr.rel target = $region3
    $region8: #{tpu_custom_call.1} parent=1 // loop_exit
      _
    %327 = vsyncpa [#allocation3], 1
    %s328 = scalar_lea.sflag [#allocation3], 1
    %329 = vsyncpa %s328, 1
    %330 = vsyncpa [#allocation4], 1
    %s331 = scalar_lea.sflag [#allocation4], 1
    %332 = vsyncpa %s331, 1

// kernel: tpu_custom_call.1
$region0: #{tpu_custom_call.1}
  #allocation0 [shape = 'u32[]', space=smem, size = 0x4, offset = 0x4, fixed_abs, tag = 'smem constant byte address 0x4 - core index']
  #allocation1 [shape = 'u32[144,128]{1,0:T(1,128)}', space=vmem, size = 0x12000, scoped, tag = 'internal scratch']
  %s0 = inlined_call_operand.hbm [shape: f32[3,8,128], index: 0, kind: input, shape index: {}]
  %s1 = inlined_call_operand.hbm [shape: f32[3,8,128], index: 1, kind: output, shape index: {}]
  %s2 = sld [smem:[#allocation0]]
  $region18: #{tpu_custom_call.1} parent=0
    _
  %s4 = ssub.s32 1, %s2
  %s5 = scalar_select 0, %s4, %s2
  $region1: #{tpu_custom_call.1} parent=0
    #allocation2 [shape = 'u8[12288]{0}', space=vmem, size = 0x3000, scoped, tag = 'input window, operand 0, single buffered']
    #allocation3 [shape = 's32[1]{0}', space=sflag, size = 0x4, scoped, tag = 'scoped memory for tpu_custom_call.1']
    #allocation4 [shape = 's32[1]{0}', space=sflag, size = 0x4, scoped, tag = 'scoped memory for tpu_custom_call.1']
    #allocation5 [shape = 'u8[12288]{0}', space=vmem, size = 0x3000, scoped, tag = 'output window, operand 0, single buffered']
    %6 = vsyncpa [#allocation3], 0
    %7 = vsyncpa [#allocation4], 0
    // Predicated region
    $region2: #{tpu_custom_call.1} parent=1 // pred_check
      _
    $region3: #{tpu_custom_call.1} parent=1 // pred_check_branch
      %9 = sbr.rel (0) target = $region5
    $region4: #{tpu_custom_call.1} parent=1 // pred_region
      %s11 = ssub.s32 384, 384
      %12 = vsyncadd [#allocation3], %s11
      %s13 = sshll.u32 [#allocation2], 4
      %s14 = int_to_ptr.vmem [resolvable:$true] %s13
      %19 = dma.hbm_to_vmem [thread:$0]  %s0, 384, %s14, [#allocation3], 128, 128, 8
    $region5: #{tpu_custom_call.1} parent=1 // pred_fallthru
      _
    // Predicated region
    $region6: #{tpu_custom_call.1} parent=1 // pred_check
      _
    $region7: #{tpu_custom_call.1} parent=1 // pred_check_branch
      %21 = sbr.rel (0) target = $region9
    $region8: #{tpu_custom_call.1} parent=1 // pred_region
      %22 = dma.done [#allocation3], 384
    $region9: #{tpu_custom_call.1} parent=1 // pred_fallthru
      _
    %v23 = vld [vmem:[#allocation2] sm:$0xff]
    %s24 = scalar_lea.vmem [#allocation2], 8
    %v25 = vld [vmem:[%s24] sm:$0xff]
    %v26 = vmax.f32 %v23, %v25
    %s27 = scalar_lea.vmem [#allocation2], 16
    %v28 = vld [vmem:[%s27] sm:$0xff]
    %v29 = vmax.f32 %v26, %v28
    %vm30 = vcmp.eq.f32.partialorder %v23, %v29
    %v31 = vsel %vm30, %v23, 0.0
    %32 = vst [vmem:[#allocation5] sm:$0xff] %v31
    %v33 = vld [vmem:[%s24] sm:$0xff]
    %vm34 = vcmp.eq.f32.partialorder %v33, %v29
    %vm35 = vmxor %vm30, 1
    %vm36 = vmand %vm34, %vm35
    %v37 = vsel %vm36, %v33, 0.0
    %s38 = scalar_lea.vmem [#allocation5], 8
    %39 = vst [vmem:[%s38] sm:$0xff] %v37
    %vm40 = vmor %vm30, %vm34
    %v41 = vld [vmem:[%s27] sm:$0xff]
    %vm42 = vcmp.eq.f32.partialorder %v41, %v29
    %vm43 = vmxor %vm40, 1
    %vm44 = vmand %vm42, %vm43
    %v45 = vsel %vm44, %v41, 0.0
    %s46 = scalar_lea.vmem [#allocation5], 16
    %47 = vst [vmem:[%s46] sm:$0xff] %v45
    // Predicated region
    $region10: #{tpu_custom_call.1} parent=1 // pred_check
      _
    $region11: #{tpu_custom_call.1} parent=1 // pred_check_branch
      %49 = sbr.rel (0) target = $region13
    $region12: #{tpu_custom_call.1} parent=1 // pred_region
      %s51 = ssub.s32 384, 384
      %52 = vsyncadd [#allocation4], %s51
      %s53 = sshll.u32 [#allocation5], 4
      %s54 = int_to_ptr.vmem [resolvable:$true] %s53
      %59 = dma.vmem_to_hbm [thread:$0]  %s54, 384, %s1, [#allocation4], 128, 128, 8
    $region13: #{tpu_custom_call.1} parent=1 // pred_fallthru
      _
    // Predicated region
    $region14: #{tpu_custom_call.1} parent=1 // pred_check
      _
    $region15: #{tpu_custom_call.1} parent=1 // pred_check_branch
      %61 = sbr.rel (0) target = $region17
    $region16: #{tpu_custom_call.1} parent=1 // pred_region
      %62 = dma.done [#allocation4], 384
    $region17: #{tpu_custom_call.1} parent=1 // pred_fallthru
      _
    %63 = vsyncpa [#allocation3], 1
    %64 = vsyncpa [#allocation4], 1

</llo_original>
